<compile_context>
chip_gen: v7x
topology: tpu7x:2x2x1
jax: 0.10.0
libtpu: 0.0.40
codegen_flags: <defaults>
</compile_context>

<pallas_src>
import jax
import jax.numpy as jnp
from jax.experimental import pallas as pl
from jax.experimental.pallas import tpu as pltpu

_LANE = 128


def _bpr_fwd_kernel(nvalid_ref, idx_ref,
                    user_hi_ref, user_lo_ref, item_hi_ref, item_lo_ref,
                    loss_ref):
    """Per-batch-block BPR loss.

    Shapes:
      nvalid_ref  : (1,)     int32  SMEM (scalar prefetch) — number of valid rows
      idx_ref     : (3, TB)  int32  packed (u, i, j) indices, batch on lanes
      user_*_ref  : (D, U)   bf16   hi / lo halves of user table (VMEM resident)
      item_*_ref  : (D, I)   bf16   hi / lo halves of item table (VMEM resident)
      loss_ref    : (1, TB)  f32    per-sample loss (lane-dense output)
    """
    n_users = user_hi_ref.shape[1]
    n_items = item_hi_ref.shape[1]
    tb = idx_ref.shape[1]

    idx = idx_ref[...]                       # (3, TB) int32
    u_idx = idx[0:1, :]                      # (1, TB)
    i_idx = idx[1:2, :]
    j_idx = idx[2:3, :]

    # Column iotas broadcast against the (1, TB) index rows — no (U,TB)/(I,TB)
    # int32 iota materialization. One-hots emitted directly in bf16 (0/±1 exact).
    # NOTE: on v5e (no bf16 VPU) the bf16 cast costs a few extra VPU ops; still
    # correct everywhere.
    rows_u = jax.lax.broadcasted_iota(jnp.int32, (n_users, 1), 0)    # (U, 1)
    rows_i = jax.lax.broadcasted_iota(jnp.int32, (n_items, 1), 0)    # (I, 1)
    onehot_u = (rows_u == u_idx).astype(jnp.bfloat16)                # (U, TB)
    sel_diff = ((rows_i == i_idx).astype(jnp.bfloat16)
                - (rows_i == j_idx).astype(jnp.bfloat16))            # (I, TB)

    # Gather on the MXU with single-pass bf16 dots; hi + lo (summed in f32)
    # reconstructs ~16 mantissa bits of the original f32 table rows.
    #   ue_t[d, r]   = user_matrix[u[r], d]
    #   diff_t[d, r] = item_matrix[i[r], d] - item_matrix[j[r], d]
    ue_t = (jnp.dot(user_hi_ref[...], onehot_u, preferred_element_type=jnp.float32)
            + jnp.dot(user_lo_ref[...], onehot_u, preferred_element_type=jnp.float32))
    diff_t = (jnp.dot(item_hi_ref[...], sel_diff, preferred_element_type=jnp.float32)
              + jnp.dot(item_lo_ref[...], sel_diff, preferred_element_type=jnp.float32))

    # Fused score difference x[r] = R_ui[r] - R_uj[r]; lane-dense (1, TB).
    # (D is small here; if D grows to 128+ and the XLU reduce binds, switch to
    # a ones-vector matmul on the MXU.)
    x = jnp.sum(ue_t * diff_t, axis=0, keepdims=True)                # (1, TB)

    # -log(sigmoid(x)) == softplus(-x), numerically stable form.
    neg_log_sig = jnp.maximum(-x, 0.0) + jnp.log1p(jnp.exp(-jnp.abs(x)))

    # In-kernel padding mask (replaces the former (1, TB) mask input DMA).
    base = pl.program_id(0) * tb
    lane_ids = jax.lax.broadcasted_iota(jnp.int32, (1, tb), 1) + base
    valid = lane_ids < nvalid_ref[0]
    loss_ref[...] = jnp.where(valid, neg_log_sig, 0.0).astype(loss_ref.dtype)


def _round_up(x, m):
    return ((x + m - 1) // m) * m


def _block_vmem_bytes(tb, n_users, n_items, emb):
    """Per-grid-block VMEM footprint estimate (bytes) — one-hots dominate."""
    onehots = (n_users + 2 * n_items) * tb * 2     # bf16 one-hot + i/j temporaries
    gathered = 4 * emb * tb * 4                    # hi/lo partials + ue_t/diff_t f32
    io = 2 * (3 * tb * 4) + 2 * (tb * 4)           # idx block (x2 buf) + out block (x2 buf)
    return onehots + gathered + io


def bpr_loss(user_matrix, item_matrix, u, i, j):
    """Pallas implementation of BPR.forward(u, i, j). Returns the scalar loss."""
    n_users, emb = user_matrix.shape
    n_items, _ = item_matrix.shape
    batch = u.shape[0]

    # One-hot (VMEM-resident) gather costs O((U+I)*TB*D) MXU flops per block vs
    # O(TB*D) for a row gather — only sensible for small tables.
    assert n_users + n_items <= 4096, (
        "embedding tables too large for the VMEM-resident one-hot gather path")
    tables_vmem = 2 * (n_users + n_items) * emb * 2    # hi+lo bf16, single copy each
    assert tables_vmem + _block_vmem_bytes(_LANE, n_users, n_items, emb) \
        <= 28 * 1024 * 1024, "tables + minimal block do not fit the VMEM budget"
    # TODO(synk): for larger tables, switch to scalar-prefetched indices + per-row
    # DMA gather from HBM (or chunk the one-hot matmul over table-row slabs).

    # Batch tile: largest multiple of 128 (<= 2048) whose per-block footprint
    # fits a 32 MiB budget on every TPU generation (v5e/v6e/v7x).
    b_ceil = _round_up(batch, _LANE)
    budget = 32 * 1024 * 1024 - tables_vmem - 4 * 1024 * 1024
    tb = _LANE
    for cand in (2048, 1024, 512, 256, 128):
        if _block_vmem_bytes(cand, n_users, n_items, emb) <= budget:
            tb = cand
            break
    tb = min(tb, b_ceil)
    # v7x megacore: keep >= 2 grid blocks whenever batch > 128 so the "parallel"
    # batch axis can actually be split across the two TensorCores.
    if b_ceil > _LANE:
        tb = min(tb, _round_up(b_ceil // 2, _LANE))

    b_pad = _round_up(batch, tb)
    pad = b_pad - batch

    # Pack (u, i, j) into one (3, b_pad) int32 operand: one small DMA per grid
    # step instead of four; padding rows point at row 0 and are masked in-kernel.
    idx = jnp.stack([u, i, j]).astype(jnp.int32)
    idx = jnp.pad(idx, ((0, 0), (0, pad)))
    nvalid = jnp.array([batch], dtype=jnp.int32)       # scalar-prefetched to SMEM

    # Layout plumbing (once, tiny): embedding dim on sublanes, rows on lanes;
    # split each table into bf16 hi/lo halves for single-pass MXU gathers.
    user_t = user_matrix.T.astype(jnp.float32)         # (D, U)
    item_t = item_matrix.T.astype(jnp.float32)         # (D, I)
    user_hi = user_t.astype(jnp.bfloat16)
    user_lo = (user_t - user_hi.astype(jnp.float32)).astype(jnp.bfloat16)
    item_hi = item_t.astype(jnp.bfloat16)
    item_lo = (item_t - item_hi.astype(jnp.float32)).astype(jnp.bfloat16)

    # VMEM limit derived from actual buffer sizes (+ slack), capped at 64 MiB so
    # it never exceeds v7x's per-TC physical VMEM.
    vmem_limit = int(min(64 * 1024 * 1024,
                         max(16 * 1024 * 1024,
                             tables_vmem
                             + 4 * _block_vmem_bytes(tb, n_users, n_items, emb)
                             + 4 * 1024 * 1024)))

    grid = (b_pad // tb,)
    idx_spec = pl.BlockSpec((3, tb), lambda b, nv: (0, b))
    # Whole-array VMEM residency: loaded once before the grid, single buffer
    # (no double-buffered re-fetch of the constant tables).
    table_spec = pl.BlockSpec(memory_space=pltpu.MemorySpace.VMEM)

    per_sample = pl.pallas_call(
        _bpr_fwd_kernel,
        out_shape=jax.ShapeDtypeStruct((1, b_pad), jnp.float32),
        grid_spec=pltpu.PrefetchScalarGridSpec(
            num_scalar_prefetch=1,
            grid=grid,
            in_specs=[idx_spec, table_spec, table_spec, table_spec, table_spec],
            out_specs=pl.BlockSpec((1, tb), lambda b, nv: (0, b)),
        ),
        compiler_params=pltpu.CompilerParams(
            dimension_semantics=("parallel",),   # independent batch blocks
            vmem_limit_bytes=vmem_limit,
        ),
    )(nvalid, idx, user_hi, user_lo, item_hi, item_lo)

    # Tiny lane-dense vector of per-sample losses reduced in JAX.
    return jnp.sum(per_sample)


def bpr_loss_ref(user_matrix, item_matrix, u, i, j):
    """Pure-JAX reference matching the PyTorch forward."""
    ue = user_matrix[u]
    r_ui = jnp.sum(ue * item_matrix[i], axis=1)
    r_uj = jnp.sum(ue * item_matrix[j], axis=1)
    return -jnp.sum(jnp.log(jax.nn.sigmoid(r_ui - r_uj)))


if __name__ == "__main__":
    # Deterministic synthetic setup (BPR.__init__ semantics).
    user_size = 64
    item_size = 128
    embedding_size = 32
    batch = 8

    key = jax.random.PRNGKey(0)
    k_user, k_item, k_u, k_i, k_j = jax.random.split(key, 5)

    # nn.init.normal_(std=0.01)
    user_matrix = 0.01 * jax.random.normal(
        k_user, (user_size, embedding_size), dtype=jnp.float32)
    item_matrix = 0.01 * jax.random.normal(
        k_item, (item_size, embedding_size), dtype=jnp.float32)

    u = jax.random.randint(k_u, (batch,), 0, user_size, dtype=jnp.int32)
    i = jax.random.randint(k_i, (batch,), 0, item_size, dtype=jnp.int32)
    j = jax.random.randint(k_j, (batch,), 0, item_size, dtype=jnp.int32)

    loss = jax.block_until_ready(bpr_loss(user_matrix, item_matrix, u, i, j))
    loss_ref = jax.block_until_ready(
        bpr_loss_ref(user_matrix, item_matrix, u, i, j))

    assert jnp.allclose(loss, loss_ref, rtol=1e-5, atol=1e-5), (loss, loss_ref)

    # TODO(synk): BPR.predict (top-k ranking with test-data masking) is an
    # eval-time path, not part of forward(); not implemented as a kernel.
    print("KERNEL_OK")
</pallas_src>

<mosaic_0001>
module attributes {stable_mosaic.version = 11 : i64} {
  func.func @_bpr_fwd_kernel(%arg0: i32, %arg1: memref<1xi32, #tpu.memory_space<smem>>, %arg2: memref<3x128xi32, #tpu.memory_space<vmem>>, %arg3: memref<32x64xbf16, #tpu.memory_space<vmem>>, %arg4: memref<32x64xbf16, #tpu.memory_space<vmem>>, %arg5: memref<32x128xbf16, #tpu.memory_space<vmem>>, %arg6: memref<32x128xbf16, #tpu.memory_space<vmem>>, %arg7: memref<1x128xf32, #tpu.memory_space<vmem>>) attributes {dimension_semantics = [#tpu.dimension_semantics<parallel>], iteration_bounds = array<i64: 1>, scalar_prefetch = 1 : i64, scratch_operands = 0 : i64, tpu.core_type = #tpu.core_type<tc>, window_params = [{transform_indices = @transform_0, window_bounds = array<i64: 3, 128>}, {pipeline_mode = #tpu.pipeline_mode<synchronous>, transform_indices = @transform_1, window_bounds = array<i64: 32, 64>}, {pipeline_mode = #tpu.pipeline_mode<synchronous>, transform_indices = @transform_2, window_bounds = array<i64: 32, 64>}, {pipeline_mode = #tpu.pipeline_mode<synchronous>, transform_indices = @transform_3, window_bounds = array<i64: 32, 128>}, {pipeline_mode = #tpu.pipeline_mode<synchronous>, transform_indices = @transform_4, window_bounds = array<i64: 32, 128>}, {transform_indices = @transform_5, window_bounds = array<i64: 1, 128>}]} {
    %c0 = arith.constant 0 : index
    %c0_0 = arith.constant 0 : index
    %0 = vector.load %arg2[%c0, %c0_0] : memref<3x128xi32, #tpu.memory_space<vmem>>, vector<3x128xi32>
    %1 = vector.extract_strided_slice %0 {offsets = [0, 0], sizes = [1, 128], strides = [1, 1]} : vector<3x128xi32> to vector<1x128xi32>
    %2 = vector.extract_strided_slice %0 {offsets = [1, 0], sizes = [1, 128], strides = [1, 1]} : vector<3x128xi32> to vector<1x128xi32>
    %3 = vector.extract_strided_slice %0 {offsets = [2, 0], sizes = [1, 128], strides = [1, 1]} : vector<3x128xi32> to vector<1x128xi32>
    %4 = tpu.iota {dimensions = array<i32: 0>} : vector<64x1xi32>
    %5 = tpu.iota {dimensions = array<i32: 0>} : vector<128x1xi32>
    %6 = vector.broadcast %4 : vector<64x1xi32> to vector<64x128xi32>
    %7 = vector.broadcast %1 : vector<1x128xi32> to vector<64x128xi32>
    %8 = arith.cmpi eq, %6, %7 : vector<64x128xi32>
    %9 = arith.extui %8 : vector<64x128xi1> to vector<64x128xi32>
    %10 = arith.sitofp %9 : vector<64x128xi32> to vector<64x128xf32>
    %11 = arith.truncf %10 : vector<64x128xf32> to vector<64x128xbf16>
    %12 = vector.broadcast %5 : vector<128x1xi32> to vector<128x128xi32>
    %13 = vector.broadcast %2 : vector<1x128xi32> to vector<128x128xi32>
    %14 = arith.cmpi eq, %12, %13 : vector<128x128xi32>
    %15 = arith.extui %14 : vector<128x128xi1> to vector<128x128xi32>
    %16 = arith.sitofp %15 : vector<128x128xi32> to vector<128x128xf32>
    %17 = arith.truncf %16 : vector<128x128xf32> to vector<128x128xbf16>
    %18 = vector.broadcast %5 : vector<128x1xi32> to vector<128x128xi32>
    %19 = vector.broadcast %3 : vector<1x128xi32> to vector<128x128xi32>
    %20 = arith.cmpi eq, %18, %19 : vector<128x128xi32>
    %21 = arith.extui %20 : vector<128x128xi1> to vector<128x128xi32>
    %22 = arith.sitofp %21 : vector<128x128xi32> to vector<128x128xf32>
    %23 = arith.truncf %22 : vector<128x128xf32> to vector<128x128xbf16>
    %24 = arith.subf %17, %23 : vector<128x128xbf16>
    %c0_1 = arith.constant 0 : index
    %c0_2 = arith.constant 0 : index
    %25 = vector.load %arg3[%c0_1, %c0_2] : memref<32x64xbf16, #tpu.memory_space<vmem>>, vector<32x64xbf16>
    %cst = arith.constant dense<0.000000e+00> : vector<32x128xf32>
    %26 = tpu.matmul %25, %11, %cst {dimension_numbers = #tpu.dot_dimension_numbers<[1], [0], [0], [1], [0, 0, 1, 1], [], []>} : vector<32x64xbf16>, vector<64x128xbf16>, vector<32x128xf32> -> vector<32x128xf32>
    %c0_3 = arith.constant 0 : index
    %c0_4 = arith.constant 0 : index
    %27 = vector.load %arg4[%c0_3, %c0_4] : memref<32x64xbf16, #tpu.memory_space<vmem>>, vector<32x64xbf16>
    %cst_5 = arith.constant dense<0.000000e+00> : vector<32x128xf32>
    %28 = tpu.matmul %27, %11, %cst_5 {dimension_numbers = #tpu.dot_dimension_numbers<[1], [0], [0], [1], [0, 0, 1, 1], [], []>} : vector<32x64xbf16>, vector<64x128xbf16>, vector<32x128xf32> -> vector<32x128xf32>
    %29 = arith.addf %26, %28 : vector<32x128xf32>
    %c0_6 = arith.constant 0 : index
    %c0_7 = arith.constant 0 : index
    %30 = vector.load %arg5[%c0_6, %c0_7] : memref<32x128xbf16, #tpu.memory_space<vmem>>, vector<32x128xbf16>
    %cst_8 = arith.constant dense<0.000000e+00> : vector<32x128xf32>
    %31 = tpu.matmul %30, %24, %cst_8 {dimension_numbers = #tpu.dot_dimension_numbers<[1], [0], [0], [1], [0, 0, 1, 1], [], []>} : vector<32x128xbf16>, vector<128x128xbf16>, vector<32x128xf32> -> vector<32x128xf32>
    %c0_9 = arith.constant 0 : index
    %c0_10 = arith.constant 0 : index
    %32 = vector.load %arg6[%c0_9, %c0_10] : memref<32x128xbf16, #tpu.memory_space<vmem>>, vector<32x128xbf16>
    %cst_11 = arith.constant dense<0.000000e+00> : vector<32x128xf32>
    %33 = tpu.matmul %32, %24, %cst_11 {dimension_numbers = #tpu.dot_dimension_numbers<[1], [0], [0], [1], [0, 0, 1, 1], [], []>} : vector<32x128xbf16>, vector<128x128xbf16>, vector<32x128xf32> -> vector<32x128xf32>
    %34 = arith.addf %31, %33 : vector<32x128xf32>
    %35 = arith.mulf %29, %34 : vector<32x128xf32>
    %cst_12 = arith.constant dense<0.000000e+00> : vector<128xf32>
    %36 = vector.multi_reduction <add>, %35, %cst_12 [0] : vector<32x128xf32> to vector<128xf32>
    %37 = vector.shape_cast %36 : vector<128xf32> to vector<1x128xf32>
    %cst_13 = arith.constant 0.000000e+00 : f32
    %38 = vector.broadcast %cst_13 : f32 to vector<1x128xf32>
    %39 = arith.subf %38, %37 : vector<1x128xf32>
    %cst_14 = arith.constant 0.000000e+00 : f32
    %40 = vector.broadcast %cst_14 : f32 to vector<1x128xf32>
    %41 = arith.maximumf %39, %40 : vector<1x128xf32>
    %42 = math.absf %37 : vector<1x128xf32>
    %cst_15 = arith.constant 0.000000e+00 : f32
    %43 = vector.broadcast %cst_15 : f32 to vector<1x128xf32>
    %44 = arith.subf %43, %42 : vector<1x128xf32>
    %45 = math.exp %44 : vector<1x128xf32>
    %46 = math.log1p %45 : vector<1x128xf32>
    %47 = arith.addf %41, %46 : vector<1x128xf32>
    %c128_i32 = arith.constant 128 : i32
    %48 = arith.muli %arg0, %c128_i32 : i32
    %49 = tpu.iota {dimensions = array<i32: 1>} : vector<1x128xi32>
    %50 = vector.broadcast %48 : i32 to vector<1x128xi32>
    %51 = arith.addi %49, %50 : vector<1x128xi32>
    %c0_16 = arith.constant 0 : index
    %52 = memref.load %arg1[%c0_16] : memref<1xi32, #tpu.memory_space<smem>>
    %53 = vector.broadcast %52 : i32 to vector<1x128xi32>
    %54 = arith.cmpi slt, %51, %53 : vector<1x128xi32>
    %cst_17 = arith.constant 0.000000e+00 : f32
    %55 = vector.broadcast %cst_17 : f32 to vector<1x128xf32>
    %56 = arith.select %54, %47, %55 : vector<1x128xi1>, vector<1x128xf32>
    %c0_18 = arith.constant 0 : index
    %c0_19 = arith.constant 0 : index
    %57 = vector.load %arg7[%c0_18, %c0_19] : memref<1x128xf32, #tpu.memory_space<vmem>>, vector<1x128xf32>
    tpu.vector_store %arg7[%c0_18, %c0_19], %56 {strides = array<i32>} : memref<1x128xf32, #tpu.memory_space<vmem>>, vector<1x128xf32>,
    return
  }
  func.func @transform_0(%arg0: i32, %arg1: memref<1xi32, #tpu.memory_space<smem>>) -> (i32, i32) {
    %c0_i32 = arith.constant 0 : i32
    %c0_i32_0 = arith.constant 0 : i32
    return %c0_i32, %arg0 : i32, i32
  }
  func.func @transform_1(%arg0: i32, %arg1: memref<1xi32, #tpu.memory_space<smem>>) -> (i32, i32) {
    %c0_i32 = arith.constant 0 : i32
    %c0_i32_0 = arith.constant 0 : i32
    %c0_i32_1 = arith.constant 0 : i32
    return %c0_i32, %c0_i32_0 : i32, i32
  }
  func.func @transform_2(%arg0: i32, %arg1: memref<1xi32, #tpu.memory_space<smem>>) -> (i32, i32) {
    %c0_i32 = arith.constant 0 : i32
    %c0_i32_0 = arith.constant 0 : i32
    %c0_i32_1 = arith.constant 0 : i32
    return %c0_i32, %c0_i32_0 : i32, i32
  }
  func.func @transform_3(%arg0: i32, %arg1: memref<1xi32, #tpu.memory_space<smem>>) -> (i32, i32) {
    %c0_i32 = arith.constant 0 : i32
    %c0_i32_0 = arith.constant 0 : i32
    %c0_i32_1 = arith.constant 0 : i32
    return %c0_i32, %c0_i32_0 : i32, i32
  }
  func.func @transform_4(%arg0: i32, %arg1: memref<1xi32, #tpu.memory_space<smem>>) -> (i32, i32) {
    %c0_i32 = arith.constant 0 : i32
    %c0_i32_0 = arith.constant 0 : i32
    %c0_i32_1 = arith.constant 0 : i32
    return %c0_i32, %c0_i32_0 : i32, i32
  }
  func.func @transform_5(%arg0: i32, %arg1: memref<1xi32, #tpu.memory_space<smem>>) -> (i32, i32) {
    %c0_i32 = arith.constant 0 : i32
    %c0_i32_0 = arith.constant 0 : i32
    return %c0_i32, %arg0 : i32, i32
  }
}

</mosaic_0001>

<llo_original>
// kernel: tpu_custom_call.1
$region0: #{tpu_custom_call.1}
  #allocation0 [shape = 'u32[]', space=smem, size = 0x4, offset = 0x4, fixed_abs, tag = 'smem constant byte address 0x4 - core index']
  #allocation1 [shape = 'u32[144,128]{1,0:T(1,128)}', space=vmem, size = 0x12000, scoped, tag = 'internal scratch']
  #allocation2 [shape = 's32[1]{0}', space=sflag, size = 0x4, scoped, tag = 'scoped memory for tpu_custom_call.1']
  #allocation3 [shape = 's32[1]{0:T(128)S(6)}', space=smem, size = 0x200, scoped, tag = 'prefetched SMEM operand 0']
  %s0 = inlined_call_operand.<no memory space> [shape: s32[1], index: 0, kind: input, shape index: {}]
  %s1 = inlined_call_operand.hbm [shape: s32[3,128], index: 1, kind: input, shape index: {}]
  %s2 = inlined_call_operand.hbm [shape: bf16[32,64], index: 2, kind: input, shape index: {}]
  %s3 = inlined_call_operand.hbm [shape: bf16[32,64], index: 3, kind: input, shape index: {}]
  %s4 = inlined_call_operand.hbm [shape: bf16[32,128], index: 4, kind: input, shape index: {}]
  %s5 = inlined_call_operand.vmem [shape: bf16[32,128], index: 5, kind: input, shape index: {}]
  %s6 = inlined_call_operand.hbm [shape: f32[1,128], index: 6, kind: output, shape index: {}]
  %s7 = sld [smem:[#allocation0]]
  $region46: #{tpu_custom_call.1} parent=0
    _
  %s9 = ssub.s32 1, %s7
  %s10 = scalar_select 0, %s9, %s7
  %11 = sst [smem:[#allocation3]] %s0
  $region1: #{tpu_custom_call.1} parent=0
    #allocation4 [shape = 'u8[2048]{0}', space=vmem, size = 0x800, scoped, tag = 'input window, operand 1, single buffered']
    #allocation5 [shape = 's32[1]{0}', space=sflag, size = 0x4, scoped, tag = 'scoped memory for tpu_custom_call.1']
    #allocation6 [shape = 's32[1]{0}', space=sflag, size = 0x4, scoped, tag = 'scoped memory for tpu_custom_call.1']
    #allocation7 [shape = 'u8[8192]{0}', space=vmem, size = 0x2000, scoped, tag = 'input window, operand 2, single buffered']
    #allocation8 [shape = 's32[1]{0}', space=sflag, size = 0x4, scoped, tag = 'scoped memory for tpu_custom_call.1']
    #allocation9 [shape = 'u8[8192]{0}', space=vmem, size = 0x2000, scoped, tag = 'input window, operand 3, single buffered']
    #allocation10 [shape = 'u8[8192]{0}', space=vmem, size = 0x2000, scoped, tag = 'input window, operand 4, single buffered']
    #allocation11 [shape = 's32[1]{0}', space=sflag, size = 0x4, scoped, tag = 'scoped memory for tpu_custom_call.1']
    #allocation12 [shape = 'u8[512]{0}', space=vmem, size = 0x400, scoped, tag = 'output window, operand 0, single buffered']
    %12 = vsyncpa [#allocation5], 0
    %13 = vsyncpa [#allocation8], 0
    %14 = vsyncpa [#allocation11], 0
    %15 = vsyncpa [#allocation6], 0
    // Predicated region
    $region2: #{tpu_custom_call.1} parent=1 // pred_check
      _
    $region3: #{tpu_custom_call.1} parent=1 // pred_check_branch
      %17 = sbr.rel (0) target = $region5
    $region4: #{tpu_custom_call.1} parent=1 // pred_region
      %s19 = ssub.s32 64, 64
      %20 = vsyncadd [#allocation5], %s19
      %s22 = sshll.u32 [#allocation4], 4
      %s23 = int_to_ptr.vmem [resolvable:$true] %s22
      %25 = dma.hbm_to_vmem [thread:$0]  %s1, 64, %s23, [#allocation5]
    $region5: #{tpu_custom_call.1} parent=1 // pred_fallthru
      _
    // Predicated region
    $region6: #{tpu_custom_call.1} parent=1 // pred_check
      _
    $region7: #{tpu_custom_call.1} parent=1 // pred_check_branch
      %27 = sbr.rel (0) target = $region9
    $region8: #{tpu_custom_call.1} parent=1 // pred_region
      %s29 = ssub.s32 256, 256
      %30 = vsyncadd [#allocation8], %s29
      %s31 = sshll.u32 [#allocation7], 4
      %s32 = int_to_ptr.vmem [resolvable:$true] %s31
      %37 = dma.hbm_to_vmem [thread:$0]  %s2, 256, %s32, [#allocation8], 64, 64, 4
    $region9: #{tpu_custom_call.1} parent=1 // pred_fallthru
      _
    // Predicated region
    $region10: #{tpu_custom_call.1} parent=1 // pred_check
      _
    $region11: #{tpu_custom_call.1} parent=1 // pred_check_branch
      %39 = sbr.rel (0) target = $region13
    $region12: #{tpu_custom_call.1} parent=1 // pred_region
      %s41 = ssub.s32 256, 256
      %42 = vsyncadd [#allocation8], %s41
      %s43 = sshll.u32 [#allocation9], 4
      %s44 = int_to_ptr.vmem [resolvable:$true] %s43
      %49 = dma.hbm_to_vmem [thread:$0]  %s3, 256, %s44, [#allocation8], 64, 64, 4
    $region13: #{tpu_custom_call.1} parent=1 // pred_fallthru
      _
    // Predicated region
    $region14: #{tpu_custom_call.1} parent=1 // pred_check
      _
    $region15: #{tpu_custom_call.1} parent=1 // pred_check_branch
      %51 = sbr.rel (0) target = $region17
    $region16: #{tpu_custom_call.1} parent=1 // pred_region
      %s53 = ssub.s32 256, 256
      %54 = vsyncadd [#allocation11], %s53
      %s55 = sshll.u32 [#allocation10], 4
      %s56 = int_to_ptr.vmem [resolvable:$true] %s55
      %61 = dma.hbm_to_vmem [thread:$0]  %s4, 256, %s56, [#allocation11], 64, 64, 4
    $region17: #{tpu_custom_call.1} parent=1 // pred_fallthru
      _
    // Predicated region
    $region18: #{tpu_custom_call.1} parent=1 // pred_check
      _
    $region19: #{tpu_custom_call.1} parent=1 // pred_check_branch
      %63 = sbr.rel (0) target = $region21
    $region20: #{tpu_custom_call.1} parent=1 // pred_region
      _
    $region21: #{tpu_custom_call.1} parent=1 // pred_fallthru
      _
    // Predicated region
    $region22: #{tpu_custom_call.1} parent=1 // pred_check
      _
    $region23: #{tpu_custom_call.1} parent=1 // pred_check_branch
      %65 = sbr.rel (0) target = $region25
    $region24: #{tpu_custom_call.1} parent=1 // pred_region
      %66 = dma.done [#allocation5], 64
    $region25: #{tpu_custom_call.1} parent=1 // pred_fallthru
      _
    // Predicated region
    $region26: #{tpu_custom_call.1} parent=1 // pred_check
      _
    $region27: #{tpu_custom_call.1} parent=1 // pred_check_branch
      %68 = sbr.rel (0) target = $region29
    $region28: #{tpu_custom_call.1} parent=1 // pred_region
      %69 = dma.done [#allocation8], 256
    $region29: #{tpu_custom_call.1} parent=1 // pred_fallthru
      _
    // Predicated region
    $region30: #{tpu_custom_call.1} parent=1 // pred_check
      _
    $region31: #{tpu_custom_call.1} parent=1 // pred_check_branch
      %71 = sbr.rel (0) target = $region33
    $region32: #{tpu_custom_call.1} parent=1 // pred_region
      %72 = dma.done [#allocation8], 256
    $region33: #{tpu_custom_call.1} parent=1 // pred_fallthru
      _
    // Predicated region
    $region34: #{tpu_custom_call.1} parent=1 // pred_check
      _
    $region35: #{tpu_custom_call.1} parent=1 // pred_check_branch
      %74 = sbr.rel (0) target = $region37
    $region36: #{tpu_custom_call.1} parent=1 // pred_region
      %75 = dma.done [#allocation11], 256
    $region37: #{tpu_custom_call.1} parent=1 // pred_fallthru
      _
    %v77 = vld [vmem:[#allocation4] sm:$0x7]
    %v78 = vlaneseq
    %v79 = vshrl.u32 %v78, 7
    %v80 = vadd.s32 %v79, 8
    %v81 = vadd.s32 %v79, 16
    %v82 = vadd.s32 %v79, 24
    %v83 = vadd.s32 %v79, 32
    %v84 = vadd.s32 %v79, 40
    %v85 = vadd.s32 %v79, 48
    %v86 = vadd.s32 %v79, 56
    %v87 = vadd.s32 %v79, 64
    %v88 = vadd.s32 %v79, 72
    %v89 = vadd.s32 %v79, 80
    %v90 = vadd.s32 %v79, 88
    %v91 = vadd.s32 %v79, 96
    %v92 = vadd.s32 %v79, 104
    %v93 = vadd.s32 %v79, 112
    %v94 = vadd.s32 %v79, 120
    %v95 = vlaneseq
    %v96 = vshrl.u32 %v95, 7
    %v97 = vsub.s32 0, %v96
    %v98 = vrot.slane %v77, %v97
    %vm99 = vcmp.eq.s32.totalorder %v79, %v98
    %vm100 = vcmp.eq.s32.totalorder %v80, %v98
    %vm101 = vcmp.eq.s32.totalorder %v81, %v98
    %vm102 = vcmp.eq.s32.totalorder %v82, %v98
    %vm103 = vcmp.eq.s32.totalorder %v83, %v98
    %vm104 = vcmp.eq.s32.totalorder %v84, %v98
    %vm105 = vcmp.eq.s32.totalorder %v85, %v98
    %vm106 = vcmp.eq.s32.totalorder %v86, %v98
    %v107 = vsel %vm99, 1, 0
    %v108 = vsel %vm100, 1, 0
    %v109 = vsel %vm101, 1, 0
    %v110 = vsel %vm102, 1, 0
    %v111 = vsel %vm103, 1, 0
    %v112 = vsel %vm104, 1, 0
    %v113 = vsel %vm105, 1, 0
    %v114 = vsel %vm106, 1, 0
    %v115 = vcvt.s32.f32 %v107
    %v116 = vcvt.s32.f32 %v108
    %v117 = vcvt.s32.f32 %v109
    %v118 = vcvt.s32.f32 %v110
    %v119 = vcvt.s32.f32 %v111
    %v120 = vcvt.s32.f32 %v112
    %v121 = vcvt.s32.f32 %v113
    %v122 = vcvt.s32.f32 %v114
    %v123 = vpack.c.bf16 %v116, %v115
    %v124 = vpack.c.bf16 %v118, %v117
    %v125 = vpack.c.bf16 %v120, %v119
    %v126 = vpack.c.bf16 %v122, %v121
    %v127 = vlaneseq
    %v128 = vshrl.u32 %v127, 7
    %v129 = vsub.s32 1, %v128
    %v130 = vrot.slane %v77, %v129
    %vm131 = vcmp.eq.s32.totalorder %v79, %v130
    %vm132 = vcmp.eq.s32.totalorder %v80, %v130
    %vm133 = vcmp.eq.s32.totalorder %v81, %v130
    %vm134 = vcmp.eq.s32.totalorder %v82, %v130
    %vm135 = vcmp.eq.s32.totalorder %v83, %v130
    %vm136 = vcmp.eq.s32.totalorder %v84, %v130
    %vm137 = vcmp.eq.s32.totalorder %v85, %v130
    %vm138 = vcmp.eq.s32.totalorder %v86, %v130
    %vm139 = vcmp.eq.s32.totalorder %v87, %v130
    %vm140 = vcmp.eq.s32.totalorder %v88, %v130
    %vm141 = vcmp.eq.s32.totalorder %v89, %v130
    %vm142 = vcmp.eq.s32.totalorder %v90, %v130
    %vm143 = vcmp.eq.s32.totalorder %v91, %v130
    %vm144 = vcmp.eq.s32.totalorder %v92, %v130
    %vm145 = vcmp.eq.s32.totalorder %v93, %v130
    %vm146 = vcmp.eq.s32.totalorder %v94, %v130
    %v147 = vsel %vm131, 1, 0
    %v148 = vsel %vm132, 1, 0
    %v149 = vsel %vm133, 1, 0
    %v150 = vsel %vm134, 1, 0
    %v151 = vsel %vm135, 1, 0
    %v152 = vsel %vm136, 1, 0
    %v153 = vsel %vm137, 1, 0
    %v154 = vsel %vm138, 1, 0
    %v155 = vsel %vm139, 1, 0
    %v156 = vsel %vm140, 1, 0
    %v157 = vsel %vm141, 1, 0
    %v158 = vsel %vm142, 1, 0
    %v159 = vsel %vm143, 1, 0
    %v160 = vsel %vm144, 1, 0
    %v161 = vsel %vm145, 1, 0
    %v162 = vsel %vm146, 1, 0
    %v163 = vcvt.s32.f32 %v147
    %v164 = vcvt.s32.f32 %v148
    %v165 = vcvt.s32.f32 %v149
    %v166 = vcvt.s32.f32 %v150
    %v167 = vcvt.s32.f32 %v151
    %v168 = vcvt.s32.f32 %v152
    %v169 = vcvt.s32.f32 %v153
    %v170 = vcvt.s32.f32 %v154
    %v171 = vcvt.s32.f32 %v155
    %v172 = vcvt.s32.f32 %v156
    %v173 = vcvt.s32.f32 %v157
    %v174 = vcvt.s32.f32 %v158
    %v175 = vcvt.s32.f32 %v159
    %v176 = vcvt.s32.f32 %v160
    %v177 = vcvt.s32.f32 %v161
    %v178 = vcvt.s32.f32 %v162
    %v179 = vpack.c.bf16 %v164, %v163
    %v180 = vpack.c.bf16 %v166, %v165
    %v181 = vpack.c.bf16 %v168, %v167
    %v182 = vpack.c.bf16 %v170, %v169
    %v183 = vpack.c.bf16 %v172, %v171
    %v184 = vpack.c.bf16 %v174, %v173
    %v185 = vpack.c.bf16 %v176, %v175
    %v186 = vpack.c.bf16 %v178, %v177
    %v187 = vlaneseq
    %v188 = vshrl.u32 %v187, 7
    %v189 = vsub.s32 2, %v188
    %v190 = vrot.slane %v77, %v189
    %vm191 = vcmp.eq.s32.totalorder %v79, %v190
    %vm192 = vcmp.eq.s32.totalorder %v80, %v190
    %vm193 = vcmp.eq.s32.totalorder %v81, %v190
    %vm194 = vcmp.eq.s32.totalorder %v82, %v190
    %vm195 = vcmp.eq.s32.totalorder %v83, %v190
    %vm196 = vcmp.eq.s32.totalorder %v84, %v190
    %vm197 = vcmp.eq.s32.totalorder %v85, %v190
    %vm198 = vcmp.eq.s32.totalorder %v86, %v190
    %vm199 = vcmp.eq.s32.totalorder %v87, %v190
    %vm200 = vcmp.eq.s32.totalorder %v88, %v190
    %vm201 = vcmp.eq.s32.totalorder %v89, %v190
    %vm202 = vcmp.eq.s32.totalorder %v90, %v190
    %vm203 = vcmp.eq.s32.totalorder %v91, %v190
    %vm204 = vcmp.eq.s32.totalorder %v92, %v190
    %vm205 = vcmp.eq.s32.totalorder %v93, %v190
    %vm206 = vcmp.eq.s32.totalorder %v94, %v190
    %v207 = vsel %vm191, 1, 0
    %v208 = vsel %vm192, 1, 0
    %v209 = vsel %vm193, 1, 0
    %v210 = vsel %vm194, 1, 0
    %v211 = vsel %vm195, 1, 0
    %v212 = vsel %vm196, 1, 0
    %v213 = vsel %vm197, 1, 0
    %v214 = vsel %vm198, 1, 0
    %v215 = vsel %vm199, 1, 0
    %v216 = vsel %vm200, 1, 0
    %v217 = vsel %vm201, 1, 0
    %v218 = vsel %vm202, 1, 0
    %v219 = vsel %vm203, 1, 0
    %v220 = vsel %vm204, 1, 0
    %v221 = vsel %vm205, 1, 0
    %v222 = vsel %vm206, 1, 0
    %v223 = vcvt.s32.f32 %v207
    %v224 = vcvt.s32.f32 %v208
    %v225 = vcvt.s32.f32 %v209
    %v226 = vcvt.s32.f32 %v210
    %v227 = vcvt.s32.f32 %v211
    %v228 = vcvt.s32.f32 %v212
    %v229 = vcvt.s32.f32 %v213
    %v230 = vcvt.s32.f32 %v214
    %v231 = vcvt.s32.f32 %v215
    %v232 = vcvt.s32.f32 %v216
    %v233 = vcvt.s32.f32 %v217
    %v234 = vcvt.s32.f32 %v218
    %v235 = vcvt.s32.f32 %v219
    %v236 = vcvt.s32.f32 %v220
    %v237 = vcvt.s32.f32 %v221
    %v238 = vcvt.s32.f32 %v222
    %v239 = vpack.c.bf16 %v224, %v223
    %v240 = vpack.c.bf16 %v226, %v225
    %v241 = vpack.c.bf16 %v228, %v227
    %v242 = vpack.c.bf16 %v230, %v229
    %v243 = vpack.c.bf16 %v232, %v231
    %v244 = vpack.c.bf16 %v234, %v233
    %v245 = vpack.c.bf16 %v236, %v235
    %v246 = vpack.c.bf16 %v238, %v237
    %v247 = vsub.bf16 %v179, %v239
    %v248 = vsub.bf16 %v180, %v240
    %v249 = vsub.bf16 %v181, %v241
    %v250 = vsub.bf16 %v182, %v242
    %v251 = vsub.bf16 %v183, %v243
    %v252 = vsub.bf16 %v184, %v244
    %v253 = vsub.bf16 %v185, %v245
    %v254 = vsub.bf16 %v186, %v246
    %v255 = vld [vmem:[#allocation7] sm:$0xf]
    %v256 = vld [vmem:[#allocation7 + $0x4] sm:$0xf]
    %v257 = vld [vmem:[#allocation7 + $0x8] sm:$0xf]
    %v258 = vld [vmem:[#allocation7 + $0xc] sm:$0xf]
    %v259 = vld [vmem:[#allocation9] sm:$0xf]
    %v260 = vld [vmem:[#allocation9 + $0x4] sm:$0xf]
    %v261 = vld [vmem:[#allocation9 + $0x8] sm:$0xf]
    %v262 = vld [vmem:[#allocation9 + $0xc] sm:$0xf]
    %v267 = vunpack.c.l.b16 %v259
    %v268 = vunpack.c.l.b16 %v260
    %v269 = vunpack.c.l.b16 %v261
    %v270 = vunpack.c.l.b16 %v262
    %v271 = vpack.c.b16 %v268, %v267
    %v272 = vpack.c.b16 %v270, %v269
    %vm273 = vcmask 523264
    %v275 = vsel %vm273, %v271, 0
    %v278 = vsel %vm273, %v272, 0
    %280 = vmatprep.subr.bf16.mxu0 0
    %281 = vmatpush1.bf16.msra.mxu0 %v123
    %282 = vmatprep.subr.bf16.mxu0 0
    %283 = vmatpush1.bf16.msra.mxu0 %v124
    %284 = vmatprep.subr.bf16.mxu0 0
    %285 = vmatpush1.bf16.msra.mxu0 %v125
    %286 = vmatprep.subr.bf16.mxu0 0
    %287 = vmatpush1.bf16.msra.mxu0 %v126
    %288 = vmatprep.subr.bf16.mxu0 0
    %289 = vmatpush1.bf16.msra.mxu0 0
    %290 = vmatprep.subr.bf16.mxu0 0
    %291 = vmatpush1.bf16.msra.mxu0 0
    %292 = vmatprep.subr.bf16.mxu0 0
    %293 = vmatpush1.bf16.msra.mxu0 0
    %294 = vmatprep.subr.bf16.mxu0 0
    %295 = vmatpush1.bf16.msra.mxu0 0
    %296 = vmatprep.subr.bf16.mxu0 0
    %297 = vmatpush1.bf16.msra.mxu0 0
    %298 = vmatprep.subr.bf16.mxu0 0
    %299 = vmatpush1.bf16.msra.mxu0 0
    %300 = vmatprep.subr.bf16.mxu0 0
    %301 = vmatpush1.bf16.msra.mxu0 0
    %302 = vmatprep.subr.bf16.mxu0 0
    %303 = vmatpush1.bf16.msra.mxu0 0
    %304 = vmatprep.subr.bf16.mxu0 0
    %305 = vmatpush1.bf16.msra.mxu0 0
    %306 = vmatprep.subr.bf16.mxu0 0
    %307 = vmatpush1.bf16.msra.mxu0 0
    %308 = vmatprep.subr.bf16.mxu0 0
    %309 = vmatpush1.bf16.msra.mxu0 0
    %310 = vmatprep.subr.bf16.mxu0 0
    %311 = vmatpush1.bf16.msra.mxu0 0
    %312 = vmatprep.mubr.bf16.mxu0 0
    %313 = vmatmul.mubr.bf16.gmra.mrb[0].mxu0 %v275
    %v314 = vpop.f32.mrb[0].mxu0
    %v315 = vadd.f32 0.0, %v314
    %v316 = vpop.f32.mrb[0].mxu0
    %v317 = vpop.f32.mrb[0].mxu0
    %v318 = vadd.f32 0.0, %v317
    %v319 = vpop.f32.mrb[0].mxu0
    %320 = vmatprep.mubr.bf16.mxu0 0
    %321 = vmatmul.mubr.bf16.gmra.mrb[0].mxu0 %v278
    %v322 = vpop.f32.mrb[0].mxu0
    %v323 = vadd.f32 0.0, %v322
    %v324 = vpop.f32.mrb[0].mxu0
    %v325 = vpop.f32.mrb[0].mxu0
    %v326 = vadd.f32 0.0, %v325
    %v327 = vpop.f32.mrb[0].mxu0
    %328 = vdwg.mxu0
    %v333 = vunpack.c.l.b16 %v255
    %v334 = vunpack.c.l.b16 %v256
    %v335 = vunpack.c.l.b16 %v257
    %v336 = vunpack.c.l.b16 %v258
    %v337 = vpack.c.b16 %v334, %v333
    %v338 = vpack.c.b16 %v336, %v335
    %v340 = vsel %vm273, %v337, 0
    %v343 = vsel %vm273, %v338, 0
    %345 = vmatprep.subr.bf16.mxu0 0
    %346 = vmatpush1.bf16.msra.mxu0 %v123
    %347 = vmatprep.subr.bf16.mxu0 0
    %348 = vmatpush1.bf16.msra.mxu0 %v124
    %349 = vmatprep.subr.bf16.mxu0 0
    %350 = vmatpush1.bf16.msra.mxu0 %v125
    %351 = vmatprep.subr.bf16.mxu0 0
    %352 = vmatpush1.bf16.msra.mxu0 %v126
    %353 = vmatprep.subr.bf16.mxu0 0
    %354 = vmatpush1.bf16.msra.mxu0 0
    %355 = vmatprep.subr.bf16.mxu0 0
    %356 = vmatpush1.bf16.msra.mxu0 0
    %357 = vmatprep.subr.bf16.mxu0 0
    %358 = vmatpush1.bf16.msra.mxu0 0
    %359 = vmatprep.subr.bf16.mxu0 0
    %360 = vmatpush1.bf16.msra.mxu0 0
    %361 = vmatprep.subr.bf16.mxu0 0
    %362 = vmatpush1.bf16.msra.mxu0 0
    %363 = vmatprep.subr.bf16.mxu0 0
    %364 = vmatpush1.bf16.msra.mxu0 0
    %365 = vmatprep.subr.bf16.mxu0 0
    %366 = vmatpush1.bf16.msra.mxu0 0
    %367 = vmatprep.subr.bf16.mxu0 0
    %368 = vmatpush1.bf16.msra.mxu0 0
    %369 = vmatprep.subr.bf16.mxu0 0
    %370 = vmatpush1.bf16.msra.mxu0 0
    %371 = vmatprep.subr.bf16.mxu0 0
    %372 = vmatpush1.bf16.msra.mxu0 0
    %373 = vmatprep.subr.bf16.mxu0 0
    %374 = vmatpush1.bf16.msra.mxu0 0
    %375 = vmatprep.subr.bf16.mxu0 0
    %376 = vmatpush1.bf16.msra.mxu0 0
    %377 = vmatprep.mubr.bf16.mxu0 0
    %378 = vmatmul.mubr.bf16.gmra.mrb[0].mxu0 %v340
    %v379 = vpop.f32.mrb[0].mxu0
    %v380 = vadd.f32 %v315, %v379
    %v381 = vpop.f32.mrb[0].mxu0
    %v382 = vpop.f32.mrb[0].mxu0
    %v383 = vadd.f32 %v318, %v382
    %v384 = vpop.f32.mrb[0].mxu0
    %385 = vmatprep.mubr.bf16.mxu0 0
    %386 = vmatmul.mubr.bf16.gmra.mrb[0].mxu0 %v343
    %v387 = vpop.f32.mrb[0].mxu0
    %v388 = vadd.f32 %v323, %v387
    %v389 = vpop.f32.mrb[0].mxu0
    %v390 = vpop.f32.mrb[0].mxu0
    %v391 = vadd.f32 %v326, %v390
    %v392 = vpop.f32.mrb[0].mxu0
    %393 = vdwg.mxu0
    %v394 = vld [vmem:[#allocation10] sm:$0xf]
    %v395 = vld [vmem:[#allocation10 + $0x4] sm:$0xf]
    %v396 = vld [vmem:[#allocation10 + $0x8] sm:$0xf]
    %v397 = vld [vmem:[#allocation10 + $0xc] sm:$0xf]
    %v398 = vld [vmem:[%s5] sm:$0xf]
    %v399 = vld [vmem:[%s5 + $0x4] sm:$0xf]
    %v400 = vld [vmem:[%s5 + $0x8] sm:$0xf]
    %v401 = vld [vmem:[%s5 + $0xc] sm:$0xf]
    %v406 = vunpack.c.l.b16 %v398
    %v407 = vunpack.c.l.b16 %v399
    %v408 = vunpack.c.l.b16 %v400
    %v409 = vunpack.c.l.b16 %v401
    %v410 = vpack.c.b16 %v407, %v406
    %v411 = vpack.c.b16 %v409, %v408
    %414 = vmatprep.subr.bf16.mxu0 0
    %415 = vmatpush1.bf16.msra.mxu0 %v247
    %416 = vmatprep.subr.bf16.mxu0 0
    %417 = vmatpush1.bf16.msra.mxu0 %v248
    %418 = vmatprep.subr.bf16.mxu0 0
    %419 = vmatpush1.bf16.msra.mxu0 %v249
    %420 = vmatprep.subr.bf16.mxu0 0
    %421 = vmatpush1.bf16.msra.mxu0 %v250
    %422 = vmatprep.subr.bf16.mxu0 0
    %423 = vmatpush1.bf16.msra.mxu0 %v251
    %424 = vmatprep.subr.bf16.mxu0 0
    %425 = vmatpush1.bf16.msra.mxu0 %v252
    %426 = vmatprep.subr.bf16.mxu0 0
    %427 = vmatpush1.bf16.msra.mxu0 %v253
    %428 = vmatprep.subr.bf16.mxu0 0
    %429 = vmatpush1.bf16.msra.mxu0 %v254
    %430 = vmatprep.subr.bf16.mxu0 0
    %431 = vmatpush1.bf16.msra.mxu0 0
    %432 = vmatprep.subr.bf16.mxu0 0
    %433 = vmatpush1.bf16.msra.mxu0 0
    %434 = vmatprep.subr.bf16.mxu0 0
    %435 = vmatpush1.bf16.msra.mxu0 0
    %436 = vmatprep.subr.bf16.mxu0 0
    %437 = vmatpush1.bf16.msra.mxu0 0
    %438 = vmatprep.subr.bf16.mxu0 0
    %439 = vmatpush1.bf16.msra.mxu0 0
    %440 = vmatprep.subr.bf16.mxu0 0
    %441 = vmatpush1.bf16.msra.mxu0 0
    %442 = vmatprep.subr.bf16.mxu0 0
    %443 = vmatpush1.bf16.msra.mxu0 0
    %444 = vmatprep.subr.bf16.mxu0 0
    %445 = vmatpush1.bf16.msra.mxu0 0
    %446 = vmatprep.mubr.bf16.mxu0 0
    %447 = vmatmul.mubr.bf16.gmra.mrb[0].mxu0 %v410
    %v448 = vpop.f32.mrb[0].mxu0
    %v449 = vadd.f32 0.0, %v448
    %v450 = vpop.f32.mrb[0].mxu0
    %v451 = vpop.f32.mrb[0].mxu0
    %v452 = vadd.f32 0.0, %v451
    %v453 = vpop.f32.mrb[0].mxu0
    %454 = vmatprep.mubr.bf16.mxu0 0
    %455 = vmatmul.mubr.bf16.gmra.mrb[0].mxu0 %v411
    %v456 = vpop.f32.mrb[0].mxu0
    %v457 = vadd.f32 0.0, %v456
    %v458 = vpop.f32.mrb[0].mxu0
    %v459 = vpop.f32.mrb[0].mxu0
    %v460 = vadd.f32 0.0, %v459
    %v461 = vpop.f32.mrb[0].mxu0
    %462 = vdwg.mxu0
    %v467 = vunpack.c.l.b16 %v394
    %v468 = vunpack.c.l.b16 %v395
    %v469 = vunpack.c.l.b16 %v396
    %v470 = vunpack.c.l.b16 %v397
    %v471 = vpack.c.b16 %v468, %v467
    %v472 = vpack.c.b16 %v470, %v469
    %475 = vmatprep.subr.bf16.mxu0 0
    %476 = vmatpush1.bf16.msra.mxu0 %v247
    %477 = vmatprep.subr.bf16.mxu0 0
    %478 = vmatpush1.bf16.msra.mxu0 %v248
    %479 = vmatprep.subr.bf16.mxu0 0
    %480 = vmatpush1.bf16.msra.mxu0 %v249
    %481 = vmatprep.subr.bf16.mxu0 0
    %482 = vmatpush1.bf16.msra.mxu0 %v250
    %483 = vmatprep.subr.bf16.mxu0 0
    %484 = vmatpush1.bf16.msra.mxu0 %v251
    %485 = vmatprep.subr.bf16.mxu0 0
    %486 = vmatpush1.bf16.msra.mxu0 %v252
    %487 = vmatprep.subr.bf16.mxu0 0
    %488 = vmatpush1.bf16.msra.mxu0 %v253
    %489 = vmatprep.subr.bf16.mxu0 0
    %490 = vmatpush1.bf16.msra.mxu0 %v254
    %491 = vmatprep.subr.bf16.mxu0 0
    %492 = vmatpush1.bf16.msra.mxu0 0
    %493 = vmatprep.subr.bf16.mxu0 0
    %494 = vmatpush1.bf16.msra.mxu0 0
    %495 = vmatprep.subr.bf16.mxu0 0
    %496 = vmatpush1.bf16.msra.mxu0 0
    %497 = vmatprep.subr.bf16.mxu0 0
    %498 = vmatpush1.bf16.msra.mxu0 0
    %499 = vmatprep.subr.bf16.mxu0 0
    %500 = vmatpush1.bf16.msra.mxu0 0
    %501 = vmatprep.subr.bf16.mxu0 0
    %502 = vmatpush1.bf16.msra.mxu0 0
    %503 = vmatprep.subr.bf16.mxu0 0
    %504 = vmatpush1.bf16.msra.mxu0 0
    %505 = vmatprep.subr.bf16.mxu0 0
    %506 = vmatpush1.bf16.msra.mxu0 0
    %507 = vmatprep.mubr.bf16.mxu0 0
    %508 = vmatmul.mubr.bf16.gmra.mrb[0].mxu0 %v471
    %v509 = vpop.f32.mrb[0].mxu0
    %v510 = vadd.f32 %v449, %v509
    %v511 = vpop.f32.mrb[0].mxu0
    %v512 = vpop.f32.mrb[0].mxu0
    %v513 = vadd.f32 %v452, %v512
    %v514 = vpop.f32.mrb[0].mxu0
    %515 = vmatprep.mubr.bf16.mxu0 0
    %516 = vmatmul.mubr.bf16.gmra.mrb[0].mxu0 %v472
    %v517 = vpop.f32.mrb[0].mxu0
    %v518 = vadd.f32 %v457, %v517
    %v519 = vpop.f32.mrb[0].mxu0
    %v520 = vpop.f32.mrb[0].mxu0
    %v521 = vadd.f32 %v460, %v520
    %v522 = vpop.f32.mrb[0].mxu0
    %523 = vdwg.mxu0
    %v524 = vmul.f32 %v380, %v510
    %v525 = vmul.f32 %v383, %v513
    %v526 = vmul.f32 %v388, %v518
    %v527 = vmul.f32 %v391, %v521
    %v528 = vadd.f32 %v524, %v525
    %v529 = vadd.f32 %v528, %v526
    %v530 = vadd.f32 %v529, %v527
    %v531 = vrot.slane %v530, 4
    %v532 = vadd.f32 %v530, %v531
    %v533 = vrot.slane %v532, 2
    %v534 = vadd.f32 %v532, %v533
    %v535 = vrot.slane %v534, 1
    %v536 = vadd.f32 %v534, %v535
    %v537 = vsub.f32 0.0, %v536
    %v538 = vmax.f32 %v537, 0.0
    %v539 = vand.u32 2147483647, %v536
    %v540 = vsub.f32 0.0, %v539
    %v541 = vmul.f32 %v540, 1.442695
    %v542 = vpow.pop %v541
    %v543 = vadd.f32 %v542, 1.0
    %v544 = vlog2.pop %v543
    %v545 = vmul.f32 %v544, 0.6931472
    %v546 = vmul.f32 -0.5, %v542
    %v547 = vadd.f32 %v546, 1.0
    %v548 = vmul.f32 %v547, %v542
    %v549 = vand.u32 2147483647, %v542
    %vm550 = vcmp.lt.f32.partialorder %v549, 0.0004427343
    %v551 = vsel %vm550, %v548, %v545
    %v552 = vadd.f32 %v538, %v551
    %s553 = smul.u32 0, 128
    %v554 = vlaneseq
    %v555 = vand.u32 %v554, 127
    %v556 = vstv %s553
    %v557 = vadd.s32 %v555, %v556
    %s558 = sld [smem:[#allocation3]]
    %v559 = vstv %s558
    %vm560 = vcmp.lt.s32.totalorder %v557, %v559
    %v561 = vsel %vm560, %v552, 0.0
    %562 = vst [vmem:[#allocation12] sm:$0x1] %v561
    // Predicated region
    $region38: #{tpu_custom_call.1} parent=1 // pred_check
      _
    $region39: #{tpu_custom_call.1} parent=1 // pred_check_branch
      %564 = sbr.rel (0) target = $region41
    $region40: #{tpu_custom_call.1} parent=1 // pred_region
      %s566 = ssub.s32 16, 16
      %567 = vsyncadd [#allocation6], %s566
      %s569 = sshll.u32 [#allocation12], 4
      %s570 = int_to_ptr.vmem [resolvable:$true] %s569
      %572 = dma.vmem_to_hbm [thread:$0]  %s570, 16, %s6, [#allocation6]
    $region41: #{tpu_custom_call.1} parent=1 // pred_fallthru
      _
    // Predicated region
    $region42: #{tpu_custom_call.1} parent=1 // pred_check
      _
    $region43: #{tpu_custom_call.1} parent=1 // pred_check_branch
      %574 = sbr.rel (0) target = $region45
    $region44: #{tpu_custom_call.1} parent=1 // pred_region
      %575 = dma.done [#allocation6], 16
    $region45: #{tpu_custom_call.1} parent=1 // pred_fallthru
      _
    %576 = vsyncpa [#allocation5], 1
    %577 = vsyncpa [#allocation8], 1
    %578 = vsyncpa [#allocation11], 1
    %579 = vsyncpa [#allocation6], 1

</llo_original>
